<compile_context>
chip_gen: v6e
topology: v6e:2x2x1
jax: 0.10.0
libtpu: 0.0.40
codegen_flags: <defaults>
</compile_context>

<pallas_src>
import math

import jax
import jax.numpy as jnp
from jax.experimental import pallas as pl
from jax.experimental.pallas import tpu as pltpu


def _round_up(a, b):
    return -(-a // b) * b


def _partial_sums_kernel(lane_mask_ref, x_ref, o_ref):
    """Per-tile lane-wide partial sums of d and d*d (d = 2nd-order lane diff)."""
    L = x_ref.shape[1]
    x = x_ref[...].astype(jnp.float32)                    # (tm, L)

    # d[j] = x[j] - 2*x[j+1] + x[j+2] at full lane width.  Shifts are cyclic
    # XLU lane rotations (pltpu.roll follows jnp.roll semantics); wrapped
    # positions only land on lanes the static mask zeroes out.
    x1 = pltpu.roll(x, shift=L - 1, axis=1)               # x[:, (j + 1) % L]
    x2 = pltpu.roll(x, shift=L - 2, axis=1)               # x[:, (j + 2) % L]
    d = (x - 2.0 * x1 + x2) * lane_mask_ref[...]          # mask by 0/1 multiply

    # Lane-wide partials; the scalar reduce happens once, outside the kernel.
    o_ref[0, 0:1, :] = jnp.sum(d, axis=0, keepdims=True)
    o_ref[0, 1:2, :] = jnp.sum(d * d, axis=0, keepdims=True)


def signal_smooth_loss(x, *, target_block_bytes=4 * 1024 * 1024,
                       target_lanes=512):
    """Pallas TPU implementation of SignalSmoothLoss.forward: std(diff(x, 2))."""
    orig_dtype = x.dtype
    W = int(x.shape[-1])
    assert W >= 3, "need at least 3 elements along the last dim for diff(n=2)"
    M = 1
    for s in x.shape[:-1]:
        M *= int(s)
    n_total = M * (W - 2)          # exact number of 2nd-order differences

    # ---- lane packing: L is a multiple of W, ideally also of 128 -----------
    lcm = W * 128 // math.gcd(W, 128)
    if lcm <= 1024:
        L = max(1, round(target_lanes / lcm)) * lcm       # lane-dense vregs
    else:
        L = max(1, target_lanes // W) * W                 # awkward-W fallback

    # ---- row tiling: ~target_block_bytes per input block -------------------
    elt = x.dtype.itemsize
    sub = max(8, 32 // elt)        # sublane tile: 8 f32 / 16 bf16 / 32 int8
    tm = max(sub, (target_block_bytes // (L * elt)) // sub * sub)

    N = M * W
    R_min = pl.cdiv(N, L)          # minimal packed rows of width L
    tm = min(tm, _round_up(R_min, sub))
    grid_m = pl.cdiv(R_min, tm)
    # v7x megacore: prefer an even grid so both TensorCores get equal work.
    if grid_m > 1 and grid_m % 2 == 1:
        tm_alt = max(sub, _round_up(pl.cdiv(R_min, grid_m + 1), sub))
        grid_alt = pl.cdiv(R_min, tm_alt)
        if grid_alt % 2 == 0:
            tm, grid_m = tm_alt, grid_alt

    # Pad so the packed array is exactly grid_m * tm rows: no ragged last tile
    # and no in-kernel row masking.  The pad consists of whole zero W-segments
    # (L and N are both multiples of W), which add 0 to both partial sums, so
    # n_total stays exact.
    R = grid_m * tm
    xf = x.reshape(-1)
    if R * L != N:
        xf = jnp.pad(xf, (0, R * L - N))
    xp = xf.reshape(R, L)

    # Static lane validity: position inside its W-segment must be <= W - 3.
    lane_in_seg = jnp.arange(L, dtype=jnp.int32) % W
    lane_mask = (lane_in_seg < (W - 2)).astype(jnp.float32).reshape(1, L)

    partials = pl.pallas_call(
        _partial_sums_kernel,
        out_shape=jax.ShapeDtypeStruct((grid_m, 2, L), jnp.float32),
        grid=(grid_m,),
        in_specs=[
            pl.BlockSpec((1, L), lambda g: (0, 0)),      # static lane mask
            pl.BlockSpec((tm, L), lambda g: (g, 0)),     # packed signal rows
        ],
        out_specs=pl.BlockSpec((1, 2, L), lambda g: (g, 0, 0)),
        compiler_params=pltpu.CompilerParams(
            dimension_semantics=("parallel",),           # megacore on v7x
            vmem_limit_bytes=48 * 1024 * 1024,
        ),
    )(lane_mask, xp)

    # ---- tiny epilogue: tree-reduce partials, unbiased variance, sqrt ------
    s = jnp.sum(partials[:, 0, :])
    ss = jnp.sum(partials[:, 1, :])
    n = jnp.float32(n_total)
    mean = s / n
    # Divide before subtracting (less cancellation than (ss - n*mean^2)/(n-1)).
    # n == 1 yields nan, same as torch.std with correction=1.
    var = (ss / n - mean * mean) * (n / (n - 1.0))
    std = jnp.sqrt(jnp.maximum(var, 0.0))
    if jnp.issubdtype(orig_dtype, jnp.floating):
        std = std.astype(orig_dtype)
    return std


def _reference(x):
    d = x[..., 2:] - 2.0 * x[..., 1:-1] + x[..., :-2]
    return jnp.std(d, ddof=1)


if __name__ == "__main__":
    # Small shape consistent with the module's NCHW usage: W=16 -> L=512.
    x = jax.random.normal(jax.random.PRNGKey(0), (2, 4, 16, 16), dtype=jnp.float32)
    loss = jax.block_until_ready(signal_smooth_loss(x))
    ref = jax.block_until_ready(_reference(x))
    assert jnp.allclose(loss, ref, rtol=1e-4, atol=1e-5), (loss, ref)

    # Multi-tile + padding + awkward-W path (W=40 -> L=lcm(40,128)=640).
    x2 = jax.random.normal(jax.random.PRNGKey(1), (3, 5, 24, 40), dtype=jnp.float32)
    loss2 = jax.block_until_ready(
        signal_smooth_loss(x2, target_block_bytes=48 * 1024))
    ref2 = jax.block_until_ready(_reference(x2))
    assert jnp.allclose(loss2, ref2, rtol=1e-4, atol=1e-5), (loss2, ref2)

    # bf16 input exercises the 16-sublane tiling and in-kernel f32 cast.
    x3 = x2.astype(jnp.bfloat16)
    loss3 = jax.block_until_ready(signal_smooth_loss(x3))
    ref3 = jax.block_until_ready(_reference(x3.astype(jnp.float32)))
    assert jnp.allclose(loss3.astype(jnp.float32), ref3, rtol=1e-2), (loss3, ref3)

    print("KERNEL_OK")
</pallas_src>

<mosaic_0001>
module attributes {stable_mosaic.version = 11 : i64} {
  func.func @_partial_sums_kernel(%arg0: i32, %arg1: memref<1x512xf32, #tpu.memory_space<vmem>>, %arg2: memref<8x512xf32, #tpu.memory_space<vmem>>, %arg3: memref<1x2x512xf32, #tpu.memory_space<vmem>>) attributes {dimension_semantics = [#tpu.dimension_semantics<parallel>], iteration_bounds = array<i64: 1>, scalar_prefetch = 0 : i64, scratch_operands = 0 : i64, tpu.core_type = #tpu.core_type<tc>, window_params = [{pipeline_mode = #tpu.pipeline_mode<synchronous>, transform_indices = @transform_0, window_bounds = array<i64: 1, 512>}, {transform_indices = @transform_1, window_bounds = array<i64: 8, 512>}, {transform_indices = @transform_2, window_bounds = array<i64: 1, 2, 512>}]} {
    %c0 = arith.constant 0 : index
    %c0_0 = arith.constant 0 : index
    %0 = vector.load %arg2[%c0, %c0_0] : memref<8x512xf32, #tpu.memory_space<vmem>>, vector<8x512xf32>
    %c511_i32 = arith.constant 511 : i32
    %1 = tpu.dynamic_rotate %0 by %c511_i32 dim 1 : vector<8x512xf32>, i32 -> vector<8x512xf32>
    %c510_i32 = arith.constant 510 : i32
    %2 = tpu.dynamic_rotate %0 by %c510_i32 dim 1 : vector<8x512xf32>, i32 -> vector<8x512xf32>
    %cst = arith.constant 2.000000e+00 : f32
    %3 = vector.broadcast %cst : f32 to vector<8x512xf32>
    %4 = arith.mulf %3, %1 : vector<8x512xf32>
    %5 = arith.subf %0, %4 : vector<8x512xf32>
    %6 = arith.addf %5, %2 : vector<8x512xf32>
    %c0_1 = arith.constant 0 : index
    %c0_2 = arith.constant 0 : index
    %7 = vector.load %arg1[%c0_1, %c0_2] : memref<1x512xf32, #tpu.memory_space<vmem>>, vector<1x512xf32>
    %8 = vector.broadcast %7 : vector<1x512xf32> to vector<8x512xf32>
    %9 = arith.mulf %6, %8 : vector<8x512xf32>
    %cst_3 = arith.constant dense<0.000000e+00> : vector<512xf32>
    %10 = vector.multi_reduction <add>, %9, %cst_3 [0] : vector<8x512xf32> to vector<512xf32>
    %11 = vector.shape_cast %10 : vector<512xf32> to vector<1x512xf32>
    %c0_4 = arith.constant 0 : index
    %c0_5 = arith.constant 0 : index
    %c0_6 = arith.constant 0 : index
    %12 = vector.load %arg3[%c0_4, %c0_5, %c0_6] : memref<1x2x512xf32, #tpu.memory_space<vmem>>, vector<1x1x512xf32>
    %13 = vector.shape_cast %12 : vector<1x1x512xf32> to vector<1x512xf32>
    %14 = vector.shape_cast %11 : vector<1x512xf32> to vector<1x1x512xf32>
    tpu.vector_store %arg3[%c0_4, %c0_5, %c0_6], %14 {strides = array<i32>} : memref<1x2x512xf32, #tpu.memory_space<vmem>>, vector<1x1x512xf32>,
    %15 = arith.mulf %9, %9 : vector<8x512xf32>
    %cst_7 = arith.constant dense<0.000000e+00> : vector<512xf32>
    %16 = vector.multi_reduction <add>, %15, %cst_7 [0] : vector<8x512xf32> to vector<512xf32>
    %17 = vector.shape_cast %16 : vector<512xf32> to vector<1x512xf32>
    %c0_8 = arith.constant 0 : index
    %c1 = arith.constant 1 : index
    %c0_9 = arith.constant 0 : index
    %18 = vector.load %arg3[%c0_8, %c1, %c0_9] : memref<1x2x512xf32, #tpu.memory_space<vmem>>, vector<1x1x512xf32>
    %19 = vector.shape_cast %18 : vector<1x1x512xf32> to vector<1x512xf32>
    %20 = vector.shape_cast %17 : vector<1x512xf32> to vector<1x1x512xf32>
    tpu.vector_store %arg3[%c0_8, %c1, %c0_9], %20 {strides = array<i32>} : memref<1x2x512xf32, #tpu.memory_space<vmem>>, vector<1x1x512xf32>,
    return
  }
  func.func @transform_0(%arg0: i32) -> (i32, i32) {
    %c0_i32 = arith.constant 0 : i32
    %c0_i32_0 = arith.constant 0 : i32
    %c0_i32_1 = arith.constant 0 : i32
    return %c0_i32, %c0_i32_0 : i32, i32
  }
  func.func @transform_1(%arg0: i32) -> (i32, i32) {
    %c0_i32 = arith.constant 0 : i32
    %c0_i32_0 = arith.constant 0 : i32
    return %arg0, %c0_i32 : i32, i32
  }
  func.func @transform_2(%arg0: i32) -> (i32, i32, i32) {
    %c0_i32 = arith.constant 0 : i32
    %c0_i32_0 = arith.constant 0 : i32
    %c0_i32_1 = arith.constant 0 : i32
    return %arg0, %c0_i32, %c0_i32_0 : i32, i32, i32
  }
}

</mosaic_0001>

<llo_original>
// kernel: tpu_custom_call.1
$region0: #{tpu_custom_call.1}
  #allocation0 [shape = 'u32[]', space=smem, size = 0x4, offset = 0x4, fixed_abs, tag = 'smem constant byte address 0x4 - core index']
  #allocation1 [shape = 'u32[144,128]{1,0:T(1,128)}', space=vmem, size = 0x12000, scoped, tag = 'internal scratch']
  %s0 = inlined_call_operand.hbm [shape: f32[1,512], index: 0, kind: input, shape index: {}]
  %s1 = inlined_call_operand.hbm [shape: f32[8,512], index: 1, kind: input, shape index: {}]
  %s2 = inlined_call_operand.hbm [shape: f32[1,2,512], index: 2, kind: output, shape index: {}]
  %s3 = sld [smem:[#allocation0]]
  $region26: #{tpu_custom_call.1} parent=0
    _
  %s5 = ssub.s32 1, %s3
  %s6 = scalar_select 0, %s5, %s3
  $region1: #{tpu_custom_call.1} parent=0
    #allocation2 [shape = 'u8[2048]{0}', space=vmem, size = 0x800, scoped, tag = 'input window, operand 0, single buffered']
    #allocation3 [shape = 's32[1]{0}', space=sflag, size = 0x4, scoped, tag = 'scoped memory for tpu_custom_call.1']
    #allocation4 [shape = 's32[1]{0}', space=sflag, size = 0x4, scoped, tag = 'scoped memory for tpu_custom_call.1']
    #allocation5 [shape = 'u8[16384]{0}', space=vmem, size = 0x4000, scoped, tag = 'input window, operand 1, single buffered']
    #allocation6 [shape = 's32[1]{0}', space=sflag, size = 0x4, scoped, tag = 'scoped memory for tpu_custom_call.1']
    #allocation7 [shape = 'u8[4096]{0}', space=vmem, size = 0x1000, scoped, tag = 'output window, operand 0, single buffered']
    %7 = vsyncpa [#allocation3], 0
    %8 = vsyncpa [#allocation6], 0
    %9 = vsyncpa [#allocation4], 0
    // Predicated region
    $region2: #{tpu_custom_call.1} parent=1 // pred_check
      _
    $region3: #{tpu_custom_call.1} parent=1 // pred_check_branch
      %11 = sbr.rel (0) target = $region5
    $region4: #{tpu_custom_call.1} parent=1 // pred_region
      %s13 = ssub.s32 64, 64
      %14 = vsyncadd [#allocation3], %s13
      %s16 = sshll.u32 [#allocation2], 4
      %s17 = int_to_ptr.vmem [resolvable:$true] %s16
      %19 = dma.hbm_to_vmem [thread:$0]  %s0, 64, %s17, [#allocation3]
    $region5: #{tpu_custom_call.1} parent=1 // pred_fallthru
      _
    // Predicated region
    $region6: #{tpu_custom_call.1} parent=1 // pred_check
      _
    $region7: #{tpu_custom_call.1} parent=1 // pred_check_branch
      %21 = sbr.rel (0) target = $region9
    $region8: #{tpu_custom_call.1} parent=1 // pred_region
      %s23 = ssub.s32 512, 512
      %24 = vsyncadd [#allocation6], %s23
      %s26 = sshll.u32 [#allocation5], 4
      %s27 = int_to_ptr.vmem [resolvable:$true] %s26
      %29 = dma.hbm_to_vmem [thread:$0]  %s1, 512, %s27, [#allocation6]
    $region9: #{tpu_custom_call.1} parent=1 // pred_fallthru
      _
    // Predicated region
    $region10: #{tpu_custom_call.1} parent=1 // pred_check
      _
    $region11: #{tpu_custom_call.1} parent=1 // pred_check_branch
      %31 = sbr.rel (0) target = $region13
    $region12: #{tpu_custom_call.1} parent=1 // pred_region
      %32 = dma.done [#allocation3], 64
    $region13: #{tpu_custom_call.1} parent=1 // pred_fallthru
      _
    // Predicated region
    $region14: #{tpu_custom_call.1} parent=1 // pred_check
      _
    $region15: #{tpu_custom_call.1} parent=1 // pred_check_branch
      %34 = sbr.rel (0) target = $region17
    $region16: #{tpu_custom_call.1} parent=1 // pred_region
      %35 = dma.done [#allocation6], 512
    $region17: #{tpu_custom_call.1} parent=1 // pred_fallthru
      _
    %v36 = vld [vmem:[#allocation5] sm:$0xff]
    %v37 = vld [vmem:[#allocation5 + $0x8] sm:$0xff]
    %v38 = vld [vmem:[#allocation5 + $0x10] sm:$0xff]
    %v39 = vld [vmem:[#allocation5 + $0x18] sm:$0xff]
    %40 = vrot.lane.b32.xlu0 %v36, 127
    %v41 = vpop.permute.xlu0 %40
    %42 = vrot.lane.b32.xlu0 %v37, 127
    %v43 = vpop.permute.xlu0 %42
    %44 = vrot.lane.b32.xlu0 %v38, 127
    %v45 = vpop.permute.xlu0 %44
    %46 = vrot.lane.b32.xlu0 %v39, 127
    %v47 = vpop.permute.xlu0 %46
    %v48 = vlaneseq
    %v49 = vand.u32 %v48, 127
    %vm50 = vcmp.lt.s32.totalorder %v49, 127
    %v51 = vsel %vm50, %v45, %v47
    %v52 = vsel %vm50, %v43, %v45
    %v53 = vsel %vm50, %v41, %v43
    %v54 = vsel %vm50, %v47, %v41
    %55 = vrot.lane.b32.xlu0 %v36, 126
    %v56 = vpop.permute.xlu0 %55
    %57 = vrot.lane.b32.xlu0 %v37, 126
    %v58 = vpop.permute.xlu0 %57
    %59 = vrot.lane.b32.xlu0 %v38, 126
    %v60 = vpop.permute.xlu0 %59
    %61 = vrot.lane.b32.xlu0 %v39, 126
    %v62 = vpop.permute.xlu0 %61
    %vm63 = vcmp.lt.s32.totalorder %v49, 126
    %v64 = vsel %vm63, %v60, %v62
    %v65 = vsel %vm63, %v58, %v60
    %v66 = vsel %vm63, %v56, %v58
    %v67 = vsel %vm63, %v62, %v56
    %v68 = vmul.f32 %v53, 2.0
    %v69 = vmul.f32 %v52, 2.0
    %v70 = vmul.f32 %v51, 2.0
    %v71 = vmul.f32 %v54, 2.0
    %v72 = vsub.f32 %v36, %v68
    %v73 = vsub.f32 %v37, %v69
    %v74 = vsub.f32 %v38, %v70
    %v75 = vsub.f32 %v39, %v71
    %v76 = vadd.f32 %v72, %v66
    %v77 = vadd.f32 %v73, %v65
    %v78 = vadd.f32 %v74, %v64
    %v79 = vadd.f32 %v75, %v67
    %v80 = vld [vmem:[#allocation2] sm:$0xf]
    %v82 = vlaneseq
    %v83 = vshrl.u32 %v82, 7
    %v84 = vsub.s32 0, %v83
    %v85 = vrot.slane %v80, %v84
    %v86 = vlaneseq
    %v87 = vshrl.u32 %v86, 7
    %v88 = vsub.s32 1, %v87
    %v89 = vrot.slane %v80, %v88
    %v90 = vlaneseq
    %v91 = vshrl.u32 %v90, 7
    %v92 = vsub.s32 2, %v91
    %v93 = vrot.slane %v80, %v92
    %v94 = vlaneseq
    %v95 = vshrl.u32 %v94, 7
    %v96 = vsub.s32 3, %v95
    %v97 = vrot.slane %v80, %v96
    %v102 = vmul.f32 %v76, %v85
    %v103 = vmul.f32 %v77, %v89
    %v104 = vmul.f32 %v78, %v93
    %v105 = vmul.f32 %v79, %v97
    %v106 = vrot.slane %v102, 4
    %v107 = vadd.f32 %v102, %v106
    %v108 = vrot.slane %v107, 2
    %v109 = vadd.f32 %v107, %v108
    %v110 = vrot.slane %v109, 1
    %v111 = vadd.f32 %v109, %v110
    %v112 = vrot.slane %v103, 4
    %v113 = vadd.f32 %v103, %v112
    %v114 = vrot.slane %v113, 2
    %v115 = vadd.f32 %v113, %v114
    %v116 = vrot.slane %v115, 1
    %v117 = vadd.f32 %v115, %v116
    %v118 = vrot.slane %v104, 4
    %v119 = vadd.f32 %v104, %v118
    %v120 = vrot.slane %v119, 2
    %v121 = vadd.f32 %v119, %v120
    %v122 = vrot.slane %v121, 1
    %v123 = vadd.f32 %v121, %v122
    %v124 = vrot.slane %v105, 4
    %v125 = vadd.f32 %v105, %v124
    %v126 = vrot.slane %v125, 2
    %v127 = vadd.f32 %v125, %v126
    %v128 = vrot.slane %v127, 1
    %v129 = vadd.f32 %v127, %v128
    %v134 = vcombine.low %v111, %v117
    %v135 = vcombine.low %v123, %v129
    %v137 = vunpack.c.l.s4 1966171168
    %v138 = vunpack.c.0.s8 %v137
    %v139 = vlaneseq
    %v140 = vshrl.u32 %v139, 7
    %v141 = vsub.s32 %v138, %v140
    %v142 = vrot.slane %v134, %v141
    %v144 = vunpack.c.l.s4 1966171168
    %v145 = vunpack.c.0.s8 %v144
    %v146 = vlaneseq
    %v147 = vshrl.u32 %v146, 7
    %v148 = vsub.s32 %v145, %v147
    %v149 = vrot.slane %v135, %v148
    %v150 = vcombine.low %v142, %v149
    %v152 = vunpack.c.l.s4 1966171168
    %v153 = vunpack.c.0.s8 %v152
    %v154 = vlaneseq
    %v155 = vshrl.u32 %v154, 7
    %v156 = vsub.s32 %v153, %v155
    %v157 = vrot.slane %v150, %v156
    %v159 = vlaneseq
    %vm160 = vcmp.ge.s32.totalorder %v159, 0
    %vm161 = vcmp.lt.s32.totalorder %v159, 512
    %vm162 = vmand %vm160, %vm161
    %163 = vst.msk [vmem:[#allocation7] ss:$2 sm:$0xf] %vm162, %v157
    %v164 = vmul.f32 %v102, %v102
    %v165 = vmul.f32 %v103, %v103
    %v166 = vmul.f32 %v104, %v104
    %v167 = vmul.f32 %v105, %v105
    %v168 = vrot.slane %v164, 4
    %v169 = vadd.f32 %v164, %v168
    %v170 = vrot.slane %v169, 2
    %v171 = vadd.f32 %v169, %v170
    %v172 = vrot.slane %v171, 1
    %v173 = vadd.f32 %v171, %v172
    %v174 = vrot.slane %v165, 4
    %v175 = vadd.f32 %v165, %v174
    %v176 = vrot.slane %v175, 2
    %v177 = vadd.f32 %v175, %v176
    %v178 = vrot.slane %v177, 1
    %v179 = vadd.f32 %v177, %v178
    %v180 = vrot.slane %v166, 4
    %v181 = vadd.f32 %v166, %v180
    %v182 = vrot.slane %v181, 2
    %v183 = vadd.f32 %v181, %v182
    %v184 = vrot.slane %v183, 1
    %v185 = vadd.f32 %v183, %v184
    %v186 = vrot.slane %v167, 4
    %v187 = vadd.f32 %v167, %v186
    %v188 = vrot.slane %v187, 2
    %v189 = vadd.f32 %v187, %v188
    %v190 = vrot.slane %v189, 1
    %v191 = vadd.f32 %v189, %v190
    %v196 = vcombine.low %v173, %v179
    %v197 = vcombine.low %v185, %v191
    %v199 = vunpack.c.l.s4 1966171168
    %v200 = vunpack.c.0.s8 %v199
    %v201 = vlaneseq
    %v202 = vshrl.u32 %v201, 7
    %v203 = vsub.s32 %v200, %v202
    %v204 = vrot.slane %v196, %v203
    %v206 = vunpack.c.l.s4 1966171168
    %v207 = vunpack.c.0.s8 %v206
    %v208 = vlaneseq
    %v209 = vshrl.u32 %v208, 7
    %v210 = vsub.s32 %v207, %v209
    %v211 = vrot.slane %v197, %v210
    %v212 = vcombine.low %v204, %v211
    %v214 = vunpack.c.l.s4 1966171168
    %v215 = vunpack.c.0.s8 %v214
    %v216 = vlaneseq
    %v217 = vshrl.u32 %v216, 7
    %v218 = vsub.s32 %v215, %v217
    %v219 = vrot.slane %v212, %v218
    %s221 = scalar_lea.vmem [#allocation7], 1
    %222 = vst.msk [vmem:[%s221] ss:$2 sm:$0xf] %vm162, %v219
    // Predicated region
    $region18: #{tpu_custom_call.1} parent=1 // pred_check
      _
    $region19: #{tpu_custom_call.1} parent=1 // pred_check_branch
      %224 = sbr.rel (0) target = $region21
    $region20: #{tpu_custom_call.1} parent=1 // pred_region
      %s226 = ssub.s32 128, 128
      %227 = vsyncadd [#allocation4], %s226
      %s229 = sshll.u32 [#allocation7], 4
      %s230 = int_to_ptr.vmem [resolvable:$true] %s229
      %232 = dma.vmem_to_hbm [thread:$0]  %s230, 128, %s2, [#allocation4]
    $region21: #{tpu_custom_call.1} parent=1 // pred_fallthru
      _
    // Predicated region
    $region22: #{tpu_custom_call.1} parent=1 // pred_check
      _
    $region23: #{tpu_custom_call.1} parent=1 // pred_check_branch
      %234 = sbr.rel (0) target = $region25
    $region24: #{tpu_custom_call.1} parent=1 // pred_region
      %235 = dma.done [#allocation4], 128
    $region25: #{tpu_custom_call.1} parent=1 // pred_fallthru
      _
    %236 = vsyncpa [#allocation3], 1
    %237 = vsyncpa [#allocation6], 1
    %238 = vsyncpa [#allocation4], 1

</llo_original>
